<compile_context>
chip_gen: v6e
topology: v6e:2x2x1
jax: 0.10.0
libtpu: 0.0.40
codegen_flags: <defaults>
</compile_context>

<pallas_src>
import jax
import jax.numpy as jnp
from jax import lax
from jax.experimental import pallas as pl
from jax.experimental.pallas import tpu as pltpu

_LANE = 128
_TARGET_X_TILE_BYTES = 8 * 1024 * 1024  # ~8 MiB of x per pipeline buffer


def _round_up(x, m):
    return (x + m - 1) // m * m


def _cdiv(a, b):
    return (a + b - 1) // b


def _sublane(dtype):
    # 8 sublanes of 32-bit; sub-32-bit dtypes pack along sublanes.
    return max(8, 32 // jnp.dtype(dtype).itemsize)


def _vmem_capacity_bytes():
    try:
        info = pltpu.get_tpu_info()
        return int(getattr(info, "vmem_capacity_bytes", 64 * 1024 * 1024))
    except Exception:
        return 64 * 1024 * 1024  # conservative fallback (v7x-sized)


def _choose_tiles(M, D, n_pad, in_itemsize, out_itemsize, budget, sub):
    """Pick (tm, tn).  Every input/output is counted double-buffered."""
    tn = n_pad
    avail = 0
    per_row = 1
    while True:
        fixed = 2 * tn * D * in_itemsize + 2 * tn * in_itemsize        # W tile + bias tile
        per_row = (2 * D * in_itemsize                                  # x tile
                   + 2 * tn * out_itemsize                              # out tile
                   + 4 * tn)                                            # f32 acc temp
        avail = budget - fixed
        if avail >= sub * per_row or tn <= _LANE:
            break
        tn = max(_LANE, _round_up(tn // 2, _LANE))
    # TODO(synk): if even tn==128 does not fit (huge input_dim), add a K grid
    # axis with a VMEM f32 accumulator + pl.when init/finalize.
    tm_fit = max(sub, avail // per_row) if avail > 0 else sub
    tm_tgt = max(sub, _TARGET_X_TILE_BYTES // (D * in_itemsize))
    tm = min(tm_fit, tm_tgt)
    # Keep >= 4 M tiles when M is large enough (2 TCs on v7x x >=2 steps each).
    tm = min(tm, _round_up(_cdiv(M, 4), sub))
    tm = max(sub, (tm // sub) * sub)       # sublane multiple
    tm = min(tm, _round_up(M, sub))        # never bigger than needed
    return tm, tn


def _fc_kernel(x_ref, w_ref, b_ref, o_ref):
    # x_ref: (TM, D), w_ref: (D, TN) (pre-transposed), b_ref: (1, TN), o_ref: (TM, TN)
    acc = jnp.dot(x_ref[...], w_ref[...], preferred_element_type=jnp.float32)
    o_ref[...] = (acc + b_ref[...].astype(jnp.float32)).astype(o_ref.dtype)


def fc_decoder_forward(x, weight, bias):
    """Equivalent of FCDecoder.forward: preds = x @ weight.T + bias.

    x:      (..., input_dim)
    weight: (nclass, input_dim)   -- PyTorch nn.Linear layout
    bias:   (nclass,)
    returns (..., nclass)
    """
    nclass, input_dim = weight.shape
    lead_shape = x.shape[:-1]

    x2d = x.reshape(-1, input_dim)
    M = x2d.shape[0]

    in_itemsize = jnp.dtype(x.dtype).itemsize
    out_dtype = x.dtype
    out_itemsize = jnp.dtype(out_dtype).itemsize
    sub = _sublane(x.dtype)

    # Lane-dense output slab: pad nclass up to a multiple of 128.
    n_pad = _round_up(nclass, _LANE)

    cap = _vmem_capacity_bytes()
    budget = (cap * 3) // 4  # leave headroom below physical VMEM

    tm, tn = _choose_tiles(M, input_dim, n_pad, in_itemsize, out_itemsize, budget, sub)
    m_tiles = _cdiv(M, tm)          # ragged last tile handled by Pallas masking
    n_tiles = n_pad // tn

    # One-time host-side prep of the (tiny) parameters: pad N, transpose weight
    # to (D, n_pad) so the kernel gets its natural (K, N) MXU feed.
    w_p = weight if n_pad == nclass else jnp.pad(weight, ((0, n_pad - nclass), (0, 0)))
    w_t = w_p.T
    b_p = bias if n_pad == nclass else jnp.pad(bias, (0, n_pad - nclass))
    b_p = b_p.reshape(1, n_pad)

    # VMEM footprint with correct double-buffer accounting (all inputs + output).
    vmem_need = (2 * tm * input_dim * in_itemsize
                 + 2 * tn * input_dim * in_itemsize
                 + 2 * tn * in_itemsize
                 + 2 * tm * tn * out_itemsize
                 + 4 * tm * tn)
    vmem_limit = int(min(budget, max(32 * 1024 * 1024, 2 * vmem_need)))

    cost = pl.CostEstimate(
        flops=2 * M * input_dim * n_pad,
        transcendentals=0,
        bytes_accessed=int(n_tiles * M * input_dim * in_itemsize
                           + n_pad * input_dim * in_itemsize
                           + M * n_pad * out_itemsize))

    grid = (n_tiles, m_tiles)  # N outer (usually 1) so W tile stays VMEM-resident
                               # across the whole inner M loop.

    out = pl.pallas_call(
        _fc_kernel,
        out_shape=jax.ShapeDtypeStruct((M, n_pad), out_dtype),
        grid_spec=pltpu.PrefetchScalarGridSpec(
            num_scalar_prefetch=0,
            grid=grid,
            in_specs=[
                pl.BlockSpec((tm, input_dim), lambda ni, mi: (mi, 0)),   # stream x
                pl.BlockSpec((input_dim, tn), lambda ni, mi: (0, ni)),   # resident W.T tile
                pl.BlockSpec((1, tn), lambda ni, mi: (0, ni)),           # resident bias tile
            ],
            out_specs=pl.BlockSpec((tm, tn), lambda ni, mi: (mi, ni)),
        ),
        compiler_params=pltpu.CompilerParams(
            dimension_semantics=("parallel", "parallel"),   # independent tiles -> megacore
            vmem_limit_bytes=vmem_limit),
        cost_estimate=cost,
    )(x2d, w_t, b_p)

    return out[:, :nclass].reshape(*lead_shape, nclass)


def init_fc_decoder_params(key, nclass, input_dim):
    """Deterministic init matching nn.Linear shapes (weight: (nclass, input_dim))."""
    kw, kb = jax.random.split(key)
    bound = 1.0 / jnp.sqrt(jnp.float32(input_dim))
    weight = jax.random.uniform(kw, (nclass, input_dim), jnp.float32,
                                minval=-bound, maxval=bound)
    bias = jax.random.uniform(kb, (nclass,), jnp.float32,
                              minval=-bound, maxval=bound)
    return weight, bias


if __name__ == "__main__":
    # Small shapes consistent with the module defaults (input_dim=512); seq=500
    # makes M=1000 -> 4 M tiles with a ragged final tile (masked-store path)
    # and a multi-step pipeline.
    batch, seq, input_dim, nclass = 2, 500, 512, 16

    key = jax.random.PRNGKey(0)
    kx, kp = jax.random.split(key)

    x = jax.random.normal(kx, (batch, seq, input_dim), jnp.float32)
    weight, bias = init_fc_decoder_params(kp, nclass, input_dim)

    preds = fc_decoder_forward(x, weight, bias)
    preds = jax.block_until_ready(preds)

    # Reference check against a high-precision JAX computation (same math as
    # torch nn.Linear).
    ref = jnp.einsum("bsd,nd->bsn", x, weight,
                     precision=lax.Precision.HIGHEST) + bias
    assert preds.shape == (batch, seq, nclass)
    assert jnp.allclose(preds, ref, atol=2e-3, rtol=2e-3)

    print("KERNEL_OK")
</pallas_src>

<mosaic_0001>
module attributes {stable_mosaic.version = 11 : i64} {
  func.func @_fc_kernel(%arg0: i32, %arg1: i32, %arg2: memref<256x512xf32, #tpu.memory_space<vmem>>, %arg3: memref<512x128xf32, #tpu.memory_space<vmem>>, %arg4: memref<1x128xf32, #tpu.memory_space<vmem>>, %arg5: memref<256x128xf32, #tpu.memory_space<vmem>>) attributes {dimension_semantics = [#tpu.dimension_semantics<parallel>, #tpu.dimension_semantics<parallel>], iteration_bounds = array<i64: 1, 4>, scalar_prefetch = 0 : i64, scratch_operands = 0 : i64, tpu.core_type = #tpu.core_type<tc>, window_params = [{transform_indices = @transform_0, window_bounds = array<i64: 256, 512>}, {transform_indices = @transform_1, window_bounds = array<i64: 512, 128>}, {transform_indices = @transform_2, window_bounds = array<i64: 1, 128>}, {transform_indices = @transform_3, window_bounds = array<i64: 256, 128>}]} {
    %c0 = arith.constant 0 : index
    %c0_0 = arith.constant 0 : index
    %0 = vector.load %arg2[%c0, %c0_0] : memref<256x512xf32, #tpu.memory_space<vmem>>, vector<256x512xf32>
    %c0_1 = arith.constant 0 : index
    %c0_2 = arith.constant 0 : index
    %1 = vector.load %arg3[%c0_1, %c0_2] : memref<512x128xf32, #tpu.memory_space<vmem>>, vector<512x128xf32>
    %cst = arith.constant dense<0.000000e+00> : vector<256x128xf32>
    %2 = tpu.matmul %0, %1, %cst {dimension_numbers = #tpu.dot_dimension_numbers<[1], [0], [0], [1], [0, 0, 1, 1], [], []>} : vector<256x512xf32>, vector<512x128xf32>, vector<256x128xf32> -> vector<256x128xf32>
    %c0_3 = arith.constant 0 : index
    %c0_4 = arith.constant 0 : index
    %3 = vector.load %arg4[%c0_3, %c0_4] : memref<1x128xf32, #tpu.memory_space<vmem>>, vector<1x128xf32>
    %4 = vector.broadcast %3 : vector<1x128xf32> to vector<256x128xf32>
    %5 = arith.addf %2, %4 : vector<256x128xf32>
    %c0_5 = arith.constant 0 : index
    %c0_6 = arith.constant 0 : index
    %6 = vector.load %arg5[%c0_5, %c0_6] : memref<256x128xf32, #tpu.memory_space<vmem>>, vector<256x128xf32>
    tpu.vector_store %arg5[%c0_5, %c0_6], %5 {strides = array<i32>} : memref<256x128xf32, #tpu.memory_space<vmem>>, vector<256x128xf32>,
    return
  }
  func.func @transform_0(%arg0: i32, %arg1: i32) -> (i32, i32) {
    %c0_i32 = arith.constant 0 : i32
    %c0_i32_0 = arith.constant 0 : i32
    return %arg1, %c0_i32 : i32, i32
  }
  func.func @transform_1(%arg0: i32, %arg1: i32) -> (i32, i32) {
    %c0_i32 = arith.constant 0 : i32
    %c0_i32_0 = arith.constant 0 : i32
    return %c0_i32, %arg0 : i32, i32
  }
  func.func @transform_2(%arg0: i32, %arg1: i32) -> (i32, i32) {
    %c0_i32 = arith.constant 0 : i32
    %c0_i32_0 = arith.constant 0 : i32
    return %c0_i32, %arg0 : i32, i32
  }
  func.func @transform_3(%arg0: i32, %arg1: i32) -> (i32, i32) {
    %c0_i32 = arith.constant 0 : i32
    return %arg1, %arg0 : i32, i32
  }
}

</mosaic_0001>

<llo_original>
// kernel: tpu_custom_call.1
$region0: #{tpu_custom_call.1}
  #allocation0 [shape = 'u32[]', space=smem, size = 0x4, offset = 0x4, fixed_abs, tag = 'smem constant byte address 0x4 - core index']
  #allocation1 [shape = 'u32[144,128]{1,0:T(1,128)}', space=vmem, size = 0x12000, scoped, tag = 'internal scratch']
  %s0 = inlined_call_operand.hbm [shape: f32[1000,512], index: 0, kind: input, shape index: {}]
  %s1 = inlined_call_operand.hbm [shape: f32[512,128], index: 1, kind: input, shape index: {}]
  %s2 = inlined_call_operand.hbm [shape: f32[1,128], index: 2, kind: input, shape index: {}]
  %s3 = inlined_call_operand.hbm [shape: f32[1000,128], index: 3, kind: output, shape index: {}]
  %s4 = sld [smem:[#allocation0]]
  $region57: #{tpu_custom_call.1} parent=0
    _
  %s6 = ssub.s32 1, %s4
  %s7 = scalar_select 0, %s6, %s4
  $region1: #{tpu_custom_call.1} parent=0
    #allocation2 [shape = 'u8[1048576]{0}', space=vmem, size = 0x100000, scoped, tag = 'input window, operand 0']
    #allocation3 [shape = 's32[2]{0}', space=sflag, size = 0x8, scoped, tag = 'scoped memory for tpu_custom_call.1']
    #allocation4 [shape = 's32[2]{0}', space=sflag, size = 0x8, scoped, tag = 'scoped memory for tpu_custom_call.1']
    #allocation5 [shape = 'u8[262144]{0}', space=vmem, size = 0x40000, scoped, tag = 'input window, operand 1, single buffered']
    #allocation6 [shape = 's32[1]{0}', space=sflag, size = 0x4, scoped, tag = 'scoped memory for tpu_custom_call.1']
    #allocation7 [shape = 'u8[512]{0}', space=vmem, size = 0x400, scoped, tag = 'input window, operand 2, single buffered']
    #allocation8 [shape = 'u8[262144]{0}', space=vmem, size = 0x40000, scoped, tag = 'output window, operand 0']
    %8 = vsyncpa [#allocation3], 0
    %s9 = scalar_lea.sflag [#allocation3], 1
    %10 = vsyncpa %s9, 0
    %11 = vsyncpa [#allocation6], 0
    %12 = vsyncpa [#allocation4], 0
    %s13 = scalar_lea.sflag [#allocation4], 1
    %14 = vsyncpa %s13, 0
    loop: start=0, step=1, limit=6
    $region2: #{tpu_custom_call.1} parent=1 // loop_pre_header
      _
    $region3: #{tpu_custom_call.1} parent=1 // loop_header
      %s16 = sphi 0, %s20
      %p17 = scmp.ge.s32.totalorder %s16, 6
      %s23 = sphi 0, %s35
      %s24 = sphi 0, %s31
      %s25 = sphi 0, %s23
      %s26 = sphi 0, %s24
      %s27 = sphi 0, %s25
      %s28 = sphi 0, %s26
      %s38 = sphi 0, %s40
      %s41 = sphi 0, %s38
      %s42 = sphi 0, %s41
      %s58 = sphi 0, %s42
      %s64 = sphi 0, %s66
      %s67 = sphi 0, %s64
      %s68 = sphi 0, %s67
      %s84 = sphi 0, %s68
      %s90 = sphi 0, %s92
      %s93 = sphi 0, %s90
      %s94 = sphi 0, %s93
      %s110 = sphi 0, %s94
      %s118 = sphi 0, %s120
      %s121 = sphi 0, %s118
      %s122 = sphi 0, %s121
      %s138 = sphi 0, %s122
    $region4: #{tpu_custom_call.1} parent=1 // loop_header_branch
      %19 = sbr.rel (%p17) target = $region8
    $region5: #{tpu_custom_call.1} parent=1 // loop_body
      %s21 = ssub.s32 %s16, 1
      %s22 = ssub.s32 %s16, 2
      %s29 = sadd.s32 1, %s24
      %p30 = scmp.ge.s32.totalorder %s29, 4
      %s31 = scalar_select %p30, 0, %s29
      %s32 = sadd.s32 1, %s23
      %s33 = scalar_select %p30, %s32, %s23
      %p34 = scmp.ge.s32.totalorder %s33, 1
      %s35 = scalar_select %p34, 0, %s33
      %s36 = ssub.s32 %s24, %s31
      %p37 = scmp.eq.s32.totalorder %s36, 0
      %s39 = sadd.s32 %s38, 1
      %s40 = scalar_select %p37, %s38, %s39
      %p43 = pneg %p37
      %p44 = scmp.eq.s32.totalorder %s16, 3
      %p45 = por %p43, %p44
      %p46 = scmp.ne.s32.totalorder %s38, %s41
      %p47 = scmp.eq.s32.totalorder %s16, 0
      %p48 = por %p46, %p47
      %p49 = scmp.ne.s32.totalorder %s38, %s41
      %p50 = scmp.eq.s32.totalorder %s21, 3
      %p51 = por %p49, %p50
      %p52 = scmp.ne.s32.totalorder %s41, %s42
      %p53 = scmp.eq.s32.totalorder %s21, 0
      %p54 = por %p52, %p53
      %p55 = scmp.ne.s32.totalorder %s41, %s42
      %p56 = scmp.eq.s32.totalorder %s22, 3
      %p57 = por %p55, %p56
      %p59 = scmp.ne.s32.totalorder %s42, %s58
      %p60 = scmp.eq.s32.totalorder %s22, 0
      %p61 = por %p59, %p60
      %s62 = ssub.s32 %s23, %s35
      %p63 = scmp.eq.s32.totalorder %s62, 0
      %s65 = sadd.s32 %s64, 1
      %s66 = scalar_select %p63, %s64, %s65
      %p69 = pneg %p63
      %p70 = scmp.eq.s32.totalorder %s16, 3
      %p71 = por %p69, %p70
      %p72 = scmp.ne.s32.totalorder %s64, %s67
      %p73 = scmp.eq.s32.totalorder %s16, 0
      %p74 = por %p72, %p73
      %p75 = scmp.ne.s32.totalorder %s64, %s67
      %p76 = scmp.eq.s32.totalorder %s21, 3
      %p77 = por %p75, %p76
      %p78 = scmp.ne.s32.totalorder %s67, %s68
      %p79 = scmp.eq.s32.totalorder %s21, 0
      %p80 = por %p78, %p79
      %p81 = scmp.ne.s32.totalorder %s67, %s68
      %p82 = scmp.eq.s32.totalorder %s22, 3
      %p83 = por %p81, %p82
      %p85 = scmp.ne.s32.totalorder %s68, %s84
      %p86 = scmp.eq.s32.totalorder %s22, 0
      %p87 = por %p85, %p86
      %s88 = ssub.s32 %s23, %s35
      %p89 = scmp.eq.s32.totalorder %s88, 0
      %s91 = sadd.s32 %s90, 1
      %s92 = scalar_select %p89, %s90, %s91
      %p95 = pneg %p89
      %p96 = scmp.eq.s32.totalorder %s16, 3
      %p97 = por %p95, %p96
      %p98 = scmp.ne.s32.totalorder %s90, %s93
      %p99 = scmp.eq.s32.totalorder %s16, 0
      %p100 = por %p98, %p99
      %p101 = scmp.ne.s32.totalorder %s90, %s93
      %p102 = scmp.eq.s32.totalorder %s21, 3
      %p103 = por %p101, %p102
      %p104 = scmp.ne.s32.totalorder %s93, %s94
      %p105 = scmp.eq.s32.totalorder %s21, 0
      %p106 = por %p104, %p105
      %p107 = scmp.ne.s32.totalorder %s93, %s94
      %p108 = scmp.eq.s32.totalorder %s22, 3
      %p109 = por %p107, %p108
      %p111 = scmp.ne.s32.totalorder %s94, %s110
      %p112 = scmp.eq.s32.totalorder %s22, 0
      %p113 = por %p111, %p112
      %s114 = ssub.s32 %s24, %s31
      %s115 = ssub.s32 %s23, %s35
      %s116 = sor.u32 %s114, %s115
      %p117 = scmp.eq.s32.totalorder %s116, 0
      %s119 = sadd.s32 %s118, 1
      %s120 = scalar_select %p117, %s118, %s119
      %p123 = pneg %p117
      %p124 = scmp.eq.s32.totalorder %s16, 3
      %p125 = por %p123, %p124
      %p126 = scmp.ne.s32.totalorder %s118, %s121
      %p127 = scmp.eq.s32.totalorder %s16, 0
      %p128 = por %p126, %p127
      %p129 = scmp.ne.s32.totalorder %s118, %s121
      %p130 = scmp.eq.s32.totalorder %s21, 3
      %p131 = por %p129, %p130
      %p132 = scmp.ne.s32.totalorder %s121, %s122
      %p133 = scmp.eq.s32.totalorder %s21, 0
      %p134 = por %p132, %p133
      %p135 = scmp.ne.s32.totalorder %s121, %s122
      %p136 = scmp.eq.s32.totalorder %s22, 3
      %p137 = por %p135, %p136
      %p139 = scmp.ne.s32.totalorder %s122, %s138
      %p140 = scmp.eq.s32.totalorder %s22, 0
      %p141 = por %p139, %p140
      %p142 = scmp.le.s32.totalorder 1, %s16
      %p143 = scmp.lt.s32.totalorder %s16, 5
      %p144 = pnand %p142, %p143
      %p145 = pneg %p144
      // Predicated region
      $region9: #{tpu_custom_call.1} parent=5 // pred_check
        _
      $region10: #{tpu_custom_call.1} parent=5 // pred_check_branch
        %147 = sbr.rel (%p144) target = $region12
      $region11: #{tpu_custom_call.1} parent=5 // pred_region
        %s148 = ssub.s32 %s16, 1
        // Predicated region
        $region13: #{tpu_custom_call.1} parent=11 // pred_check
          %p149 = pneg %p80
        $region14: #{tpu_custom_call.1} parent=11 // pred_check_branch
          %151 = sbr.rel (%p149) target = $region16
        $region15: #{tpu_custom_call.1} parent=11 // pred_region
          %s153 = ssub.s32 8192, 8192
          %154 = vsyncadd [#allocation6], %s153
          %s155 = smul.addr %s25, 128
          %s156 = scalar_lea.hbm %s1, %s155
          %s157 = sshll.u32 [#allocation5], 4
          %s158 = int_to_ptr.vmem [resolvable:$true] %s157
          %163 = dma.hbm_to_vmem [thread:$0]  %s156, 8192, %s158, [#allocation6], 128, 128, 8
        $region16: #{tpu_custom_call.1} parent=11 // pred_fallthru
          _
        // Predicated region
        $region17: #{tpu_custom_call.1} parent=11 // pred_check
          %p164 = pneg %p106
        $region18: #{tpu_custom_call.1} parent=11 // pred_check_branch
          %166 = sbr.rel (%p164) target = $region20
        $region19: #{tpu_custom_call.1} parent=11 // pred_region
          %s168 = ssub.s32 16, 16
          %169 = vsyncadd [#allocation6], %s168
          %s170 = smul.addr %s25, 16
          %s171 = scalar_lea.hbm %s2, %s170
          %s173 = sshll.u32 [#allocation7], 4
          %s174 = int_to_ptr.vmem [resolvable:$true] %s173
          %176 = dma.hbm_to_vmem [thread:$0]  %s171, 16, %s174, [#allocation6]
        $region20: #{tpu_custom_call.1} parent=11 // pred_fallthru
          _
      $region12: #{tpu_custom_call.1} parent=5 // pred_fallthru
        _
      %p177 = scmp.lt.s32.totalorder %s16, 4
      // Predicated region
      $region21: #{tpu_custom_call.1} parent=5 // pred_check
        %p178 = pneg %p177
      $region22: #{tpu_custom_call.1} parent=5 // pred_check_branch
        %180 = sbr.rel (%p178) target = $region24
      $region23: #{tpu_custom_call.1} parent=5 // pred_region
        // Predicated region
        $region25: #{tpu_custom_call.1} parent=23 // pred_check
          %p181 = pneg %p48
        $region26: #{tpu_custom_call.1} parent=23 // pred_check_branch
          %183 = sbr.rel (%p181) target = $region28
        $region27: #{tpu_custom_call.1} parent=23 // pred_region
          %s184 = sand.u32 %s38, 1
          %s185 = scalar_lea.sflag [#allocation3], %s184
          %s186 = sand.u32 %s38, 1
          %s187 = smul.addr %s186, 1024
          %s188 = scalar_lea.vmem [#allocation2], %s187
          %s189 = smul.u32 32, %s24
          %s190 = ssub.s32 125, %s189
          %p191 = scmp.lt.s32.totalorder %s190, 32
          %s192 = scalar_select %p191, %s190, 32
          %s193 = smul.u32 128, %s192
          %s194 = smul.u32 %s193, 4
          %s196 = ssub.s32 16384, %s194
          %197 = vsyncadd %s185, %s196
          %p198 = scmp.ne.s32.totalorder 0, %s194
          %s199 = smul.addr %s189, 4
          %s200 = smul.addr %s199, 128
          %s201 = scalar_lea.hbm %s0, %s200
          %s202 = smul.u32 32, %s192
          %s203 = sshll.u32 %s188, 4
          %s204 = int_to_ptr.vmem [resolvable:$true] %s203
          %s205 = sshll.u32 %s202, 4
          %209 = dma.hbm_to_vmem [thread:$0]  (%p198), %s201, %s205, %s204, %s185, 512, 512, 32
        $region28: #{tpu_custom_call.1} parent=23 // pred_fallthru
          _
      $region24: #{tpu_custom_call.1} parent=5 // pred_fallthru
        _
      %p210 = scmp.le.s32.totalorder 1, %s16
      %p211 = scmp.lt.s32.totalorder %s16, 5
      %p212 = pnand %p210, %p211
      %p213 = pneg %p212
      // Predicated region
      $region29: #{tpu_custom_call.1} parent=5 // pred_check
        _
      $region30: #{tpu_custom_call.1} parent=5 // pred_check_branch
        %215 = sbr.rel (%p212) target = $region32
      $region31: #{tpu_custom_call.1} parent=5 // pred_region
        %s216 = ssub.s32 %s16, 1
        %s217 = sand.u32 %s41, 1
        %s218 = scalar_lea.sflag [#allocation3], %s217
        %s219 = sand.u32 %s41, 1
        %s220 = smul.addr %s219, 1024
        %s221 = scalar_lea.vmem [#allocation2], %s220
        // Predicated region
        $region33: #{tpu_custom_call.1} parent=31 // pred_check
          %p222 = pneg %p54
        $region34: #{tpu_custom_call.1} parent=31 // pred_check_branch
          %224 = sbr.rel (%p222) target = $region36
        $region35: #{tpu_custom_call.1} parent=31 // pred_region
          %225 = dma.done %s218, 16384
        $region36: #{tpu_custom_call.1} parent=31 // pred_fallthru
          _
        // Predicated region
        $region37: #{tpu_custom_call.1} parent=31 // pred_check
          %p226 = pneg %p80
        $region38: #{tpu_custom_call.1} parent=31 // pred_check_branch
          %228 = sbr.rel (%p226) target = $region40
        $region39: #{tpu_custom_call.1} parent=31 // pred_region
          %229 = dma.done [#allocation6], 8192
        $region40: #{tpu_custom_call.1} parent=31 // pred_fallthru
          _
        // Predicated region
        $region41: #{tpu_custom_call.1} parent=31 // pred_check
          %p230 = pneg %p106
        $region42: #{tpu_custom_call.1} parent=31 // pred_check_branch
          %232 = sbr.rel (%p230) target = $region44
        $region43: #{tpu_custom_call.1} parent=31 // pred_region
          %233 = dma.done [#allocation6], 16
        $region44: #{tpu_custom_call.1} parent=31 // pred_fallthru
          _
        %s234 = sand.u32 %s41, 1
        %s235 = scalar_lea.sflag [#allocation3], %s234
        %s236 = sand.u32 %s41, 1
        %s237 = smul.addr %s236, 1024
        %s238 = scalar_lea.vmem [#allocation2], %s237
        %p239 = pneg %p54
        %p240 = pneg %p51
        %p241 = pneg %p80
        %p242 = pneg %p77
        %p243 = pneg %p106
        %p244 = pneg %p103
        %p245 = pneg %p134
        %p246 = pneg %p131
        %s247 = sand.u32 %s121, 1
        %s248 = scalar_lea.sflag [#allocation4], %s247
        %s249 = sand.u32 %s121, 1
        %s250 = smul.addr %s249, 256
        %s251 = scalar_lea.vmem [#allocation8], %s250
        %s252 = smul.u32 32, %s26
        %s253 = ssub.s32 125, %s252
        %p254 = scmp.lt.s32.totalorder %s253, 32
        %s255 = scalar_select %p254, %s253, 32
        %s256 = smul.u32 128, %s255
        %s257 = smul.u32 %s256, 4
        %s258 = smul.u32 32, %s26
        %s259 = ssub.s32 125, %s258
        %p260 = scmp.lt.s32.totalorder %s259, 32
        %s261 = scalar_select %p260, %s259, 32
        %s262 = smul.u32 128, %s261
        %v263 = vld [vmem:[%s221] sm:$0xff]
        %v264 = vld [vmem:[%s221 + $0x8] sm:$0xff]
        %v265 = vld [vmem:[%s221 + $0x10] sm:$0xff]
        %v266 = vld [vmem:[%s221 + $0x18] sm:$0xff]
        %v267 = vld [vmem:[%s221 + $0x20] sm:$0xff]
        %v268 = vld [vmem:[%s221 + $0x28] sm:$0xff]
        %v269 = vld [vmem:[%s221 + $0x30] sm:$0xff]
        %v270 = vld [vmem:[%s221 + $0x38] sm:$0xff]
        %v271 = vld [vmem:[%s221 + $0x40] sm:$0xff]
        %v272 = vld [vmem:[%s221 + $0x48] sm:$0xff]
        %v273 = vld [vmem:[%s221 + $0x50] sm:$0xff]
        %v274 = vld [vmem:[%s221 + $0x58] sm:$0xff]
        %v275 = vld [vmem:[%s221 + $0x60] sm:$0xff]
        %v276 = vld [vmem:[%s221 + $0x68] sm:$0xff]
        %v277 = vld [vmem:[%s221 + $0x70] sm:$0xff]
        %v278 = vld [vmem:[%s221 + $0x78] sm:$0xff]
        %v279 = vld [vmem:[%s221 + $0x80] sm:$0xff]
        %v280 = vld [vmem:[%s221 + $0x88] sm:$0xff]
        %v281 = vld [vmem:[%s221 + $0x90] sm:$0xff]
        %v282 = vld [vmem:[%s221 + $0x98] sm:$0xff]
        %v283 = vld [vmem:[%s221 + $0xa0] sm:$0xff]
        %v284 = vld [vmem:[%s221 + $0xa8] sm:$0xff]
        %v285 = vld [vmem:[%s221 + $0xb0] sm:$0xff]
        %v286 = vld [vmem:[%s221 + $0xb8] sm:$0xff]
        %v287 = vld [vmem:[%s221 + $0xc0] sm:$0xff]
        %v288 = vld [vmem:[%s221 + $0xc8] sm:$0xff]
        %v289 = vld [vmem:[%s221 + $0xd0] sm:$0xff]
        %v290 = vld [vmem:[%s221 + $0xd8] sm:$0xff]
        %v291 = vld [vmem:[%s221 + $0xe0] sm:$0xff]
        %v292 = vld [vmem:[%s221 + $0xe8] sm:$0xff]
        %v293 = vld [vmem:[%s221 + $0xf0] sm:$0xff]
        %v294 = vld [vmem:[%s221 + $0xf8] sm:$0xff]
        %v295 = vld [vmem:[%s221 + $0x100] sm:$0xff]
        %v296 = vld [vmem:[%s221 + $0x108] sm:$0xff]
        %v297 = vld [vmem:[%s221 + $0x110] sm:$0xff]
        %v298 = vld [vmem:[%s221 + $0x118] sm:$0xff]
        %v299 = vld [vmem:[%s221 + $0x120] sm:$0xff]
        %v300 = vld [vmem:[%s221 + $0x128] sm:$0xff]
        %v301 = vld [vmem:[%s221 + $0x130] sm:$0xff]
        %v302 = vld [vmem:[%s221 + $0x138] sm:$0xff]
        %v303 = vld [vmem:[%s221 + $0x140] sm:$0xff]
        %v304 = vld [vmem:[%s221 + $0x148] sm:$0xff]
        %v305 = vld [vmem:[%s221 + $0x150] sm:$0xff]
        %v306 = vld [vmem:[%s221 + $0x158] sm:$0xff]
        %v307 = vld [vmem:[%s221 + $0x160] sm:$0xff]
        %v308 = vld [vmem:[%s221 + $0x168] sm:$0xff]
        %v309 = vld [vmem:[%s221 + $0x170] sm:$0xff]
        %v310 = vld [vmem:[%s221 + $0x178] sm:$0xff]
        %v311 = vld [vmem:[%s221 + $0x180] sm:$0xff]
        %v312 = vld [vmem:[%s221 + $0x188] sm:$0xff]
        %v313 = vld [vmem:[%s221 + $0x190] sm:$0xff]
        %v314 = vld [vmem:[%s221 + $0x198] sm:$0xff]
        %v315 = vld [vmem:[%s221 + $0x1a0] sm:$0xff]
        %v316 = vld [vmem:[%s221 + $0x1a8] sm:$0xff]
        %v317 = vld [vmem:[%s221 + $0x1b0] sm:$0xff]
        %v318 = vld [vmem:[%s221 + $0x1b8] sm:$0xff]
        %v319 = vld [vmem:[%s221 + $0x1c0] sm:$0xff]
        %v320 = vld [vmem:[%s221 + $0x1c8] sm:$0xff]
        %v321 = vld [vmem:[%s221 + $0x1d0] sm:$0xff]
        %v322 = vld [vmem:[%s221 + $0x1d8] sm:$0xff]
        %v323 = vld [vmem:[%s221 + $0x1e0] sm:$0xff]
        %v324 = vld [vmem:[%s221 + $0x1e8] sm:$0xff]
        %v325 = vld [vmem:[%s221 + $0x1f0] sm:$0xff]
        %v326 = vld [vmem:[%s221 + $0x1f8] sm:$0xff]
        %v327 = vld [vmem:[%s221 + $0x200] sm:$0xff]
        %v328 = vld [vmem:[%s221 + $0x208] sm:$0xff]
        %v329 = vld [vmem:[%s221 + $0x210] sm:$0xff]
        %v330 = vld [vmem:[%s221 + $0x218] sm:$0xff]
        %v331 = vld [vmem:[%s221 + $0x220] sm:$0xff]
        %v332 = vld [vmem:[%s221 + $0x228] sm:$0xff]
        %v333 = vld [vmem:[%s221 + $0x230] sm:$0xff]
        %v334 = vld [vmem:[%s221 + $0x238] sm:$0xff]
        %v335 = vld [vmem:[%s221 + $0x240] sm:$0xff]
        %v336 = vld [vmem:[%s221 + $0x248] sm:$0xff]
        %v337 = vld [vmem:[%s221 + $0x250] sm:$0xff]
        %v338 = vld [vmem:[%s221 + $0x258] sm:$0xff]
        %v339 = vld [vmem:[%s221 + $0x260] sm:$0xff]
        %v340 = vld [vmem:[%s221 + $0x268] sm:$0xff]
        %v341 = vld [vmem:[%s221 + $0x270] sm:$0xff]
        %v342 = vld [vmem:[%s221 + $0x278] sm:$0xff]
        %v343 = vld [vmem:[%s221 + $0x280] sm:$0xff]
        %v344 = vld [vmem:[%s221 + $0x288] sm:$0xff]
        %v345 = vld [vmem:[%s221 + $0x290] sm:$0xff]
        %v346 = vld [vmem:[%s221 + $0x298] sm:$0xff]
        %v347 = vld [vmem:[%s221 + $0x2a0] sm:$0xff]
        %v348 = vld [vmem:[%s221 + $0x2a8] sm:$0xff]
        %v349 = vld [vmem:[%s221 + $0x2b0] sm:$0xff]
        %v350 = vld [vmem:[%s221 + $0x2b8] sm:$0xff]
        %v351 = vld [vmem:[%s221 + $0x2c0] sm:$0xff]
        %v352 = vld [vmem:[%s221 + $0x2c8] sm:$0xff]
        %v353 = vld [vmem:[%s221 + $0x2d0] sm:$0xff]
        %v354 = vld [vmem:[%s221 + $0x2d8] sm:$0xff]
        %v355 = vld [vmem:[%s221 + $0x2e0] sm:$0xff]
        %v356 = vld [vmem:[%s221 + $0x2e8] sm:$0xff]
        %v357 = vld [vmem:[%s221 + $0x2f0] sm:$0xff]
        %v358 = vld [vmem:[%s221 + $0x2f8] sm:$0xff]
        %v359 = vld [vmem:[%s221 + $0x300] sm:$0xff]
        %v360 = vld [vmem:[%s221 + $0x308] sm:$0xff]
        %v361 = vld [vmem:[%s221 + $0x310] sm:$0xff]
        %v362 = vld [vmem:[%s221 + $0x318] sm:$0xff]
        %v363 = vld [vmem:[%s221 + $0x320] sm:$0xff]
        %v364 = vld [vmem:[%s221 + $0x328] sm:$0xff]
        %v365 = vld [vmem:[%s221 + $0x330] sm:$0xff]
        %v366 = vld [vmem:[%s221 + $0x338] sm:$0xff]
        %v367 = vld [vmem:[%s221 + $0x340] sm:$0xff]
        %v368 = vld [vmem:[%s221 + $0x348] sm:$0xff]
        %v369 = vld [vmem:[%s221 + $0x350] sm:$0xff]
        %v370 = vld [vmem:[%s221 + $0x358] sm:$0xff]
        %v371 = vld [vmem:[%s221 + $0x360] sm:$0xff]
        %v372 = vld [vmem:[%s221 + $0x368] sm:$0xff]
        %v373 = vld [vmem:[%s221 + $0x370] sm:$0xff]
        %v374 = vld [vmem:[%s221 + $0x378] sm:$0xff]
        %v375 = vld [vmem:[%s221 + $0x380] sm:$0xff]
        %v376 = vld [vmem:[%s221 + $0x388] sm:$0xff]
        %v377 = vld [vmem:[%s221 + $0x390] sm:$0xff]
        %v378 = vld [vmem:[%s221 + $0x398] sm:$0xff]
        %v379 = vld [vmem:[%s221 + $0x3a0] sm:$0xff]
        %v380 = vld [vmem:[%s221 + $0x3a8] sm:$0xff]
        %v381 = vld [vmem:[%s221 + $0x3b0] sm:$0xff]
        %v382 = vld [vmem:[%s221 + $0x3b8] sm:$0xff]
        %v383 = vld [vmem:[%s221 + $0x3c0] sm:$0xff]
        %v384 = vld [vmem:[%s221 + $0x3c8] sm:$0xff]
        %v385 = vld [vmem:[%s221 + $0x3d0] sm:$0xff]
        %v386 = vld [vmem:[%s221 + $0x3d8] sm:$0xff]
        %v387 = vld [vmem:[%s221 + $0x3e0] sm:$0xff]
        %v388 = vld [vmem:[%s221 + $0x3e8] sm:$0xff]
        %v389 = vld [vmem:[%s221 + $0x3f0] sm:$0xff]
        %v390 = vld [vmem:[%s221 + $0x3f8] sm:$0xff]
        %v391 = vld [vmem:[#allocation5] sm:$0xff]
        %v392 = vld [vmem:[#allocation5 + $0x8] sm:$0xff]
        %v393 = vld [vmem:[#allocation5 + $0x10] sm:$0xff]
        %v394 = vld [vmem:[#allocation5 + $0x18] sm:$0xff]
        %v395 = vld [vmem:[#allocation5 + $0x20] sm:$0xff]
        %v396 = vld [vmem:[#allocation5 + $0x28] sm:$0xff]
        %v397 = vld [vmem:[#allocation5 + $0x30] sm:$0xff]
        %v398 = vld [vmem:[#allocation5 + $0x38] sm:$0xff]
        %v399 = vld [vmem:[#allocation5 + $0x40] sm:$0xff]
        %v400 = vld [vmem:[#allocation5 + $0x48] sm:$0xff]
        %v401 = vld [vmem:[#allocation5 + $0x50] sm:$0xff]
        %v402 = vld [vmem:[#allocation5 + $0x58] sm:$0xff]
        %v403 = vld [vmem:[#allocation5 + $0x60] sm:$0xff]
        %v404 = vld [vmem:[#allocation5 + $0x68] sm:$0xff]
        %v405 = vld [vmem:[#allocation5 + $0x70] sm:$0xff]
        %v406 = vld [vmem:[#allocation5 + $0x78] sm:$0xff]
        %v407 = vld [vmem:[#allocation5 + $0x80] sm:$0xff]
        %v408 = vld [vmem:[#allocation5 + $0x88] sm:$0xff]
        %v409 = vld [vmem:[#allocation5 + $0x90] sm:$0xff]
        %v410 = vld [vmem:[#allocation5 + $0x98] sm:$0xff]
        %v411 = vld [vmem:[#allocation5 + $0xa0] sm:$0xff]
        %v412 = vld [vmem:[#allocation5 + $0xa8] sm:$0xff]
        %v413 = vld [vmem:[#allocation5 + $0xb0] sm:$0xff]
        %v414 = vld [vmem:[#allocation5 + $0xb8] sm:$0xff]
        %v415 = vld [vmem:[#allocation5 + $0xc0] sm:$0xff]
        %v416 = vld [vmem:[#allocation5 + $0xc8] sm:$0xff]
        %v417 = vld [vmem:[#allocation5 + $0xd0] sm:$0xff]
        %v418 = vld [vmem:[#allocation5 + $0xd8] sm:$0xff]
        %v419 = vld [vmem:[#allocation5 + $0xe0] sm:$0xff]
        %v420 = vld [vmem:[#allocation5 + $0xe8] sm:$0xff]
        %v421 = vld [vmem:[#allocation5 + $0xf0] sm:$0xff]
        %v422 = vld [vmem:[#allocation5 + $0xf8] sm:$0xff]
        %v423 = vld [vmem:[#allocation5 + $0x100] sm:$0xff]
        %v424 = vld [vmem:[#allocation5 + $0x108] sm:$0xff]
        %v425 = vld [vmem:[#allocation5 + $0x110] sm:$0xff]
        %v426 = vld [vmem:[#allocation5 + $0x118] sm:$0xff]
        %v427 = vld [vmem:[#allocation5 + $0x120] sm:$0xff]
        %v428 = vld [vmem:[#allocation5 + $0x128] sm:$0xff]
        %v429 = vld [vmem:[#allocation5 + $0x130] sm:$0xff]
        %v430 = vld [vmem:[#allocation5 + $0x138] sm:$0xff]
        %v431 = vld [vmem:[#allocation5 + $0x140] sm:$0xff]
        %v432 = vld [vmem:[#allocation5 + $0x148] sm:$0xff]
        %v433 = vld [vmem:[#allocation5 + $0x150] sm:$0xff]
        %v434 = vld [vmem:[#allocation5 + $0x158] sm:$0xff]
        %v435 = vld [vmem:[#allocation5 + $0x160] sm:$0xff]
        %v436 = vld [vmem:[#allocation5 + $0x168] sm:$0xff]
        %v437 = vld [vmem:[#allocation5 + $0x170] sm:$0xff]
        %v438 = vld [vmem:[#allocation5 + $0x178] sm:$0xff]
        %v439 = vld [vmem:[#allocation5 + $0x180] sm:$0xff]
        %v440 = vld [vmem:[#allocation5 + $0x188] sm:$0xff]
        %v441 = vld [vmem:[#allocation5 + $0x190] sm:$0xff]
        %v442 = vld [vmem:[#allocation5 + $0x198] sm:$0xff]
        %v443 = vld [vmem:[#allocation5 + $0x1a0] sm:$0xff]
        %v444 = vld [vmem:[#allocation5 + $0x1a8] sm:$0xff]
        %v445 = vld [vmem:[#allocation5 + $0x1b0] sm:$0xff]
        %v446 = vld [vmem:[#allocation5 + $0x1b8] sm:$0xff]
        %v447 = vld [vmem:[#allocation5 + $0x1c0] sm:$0xff]
        %v448 = vld [vmem:[#allocation5 + $0x1c8] sm:$0xff]
        %v449 = vld [vmem:[#allocation5 + $0x1d0] sm:$0xff]
        %v450 = vld [vmem:[#allocation5 + $0x1d8] sm:$0xff]
        %v451 = vld [vmem:[#allocation5 + $0x1e0] sm:$0xff]
        %v452 = vld [vmem:[#allocation5 + $0x1e8] sm:$0xff]
        %v453 = vld [vmem:[#allocation5 + $0x1f0] sm:$0xff]
        %v454 = vld [vmem:[#allocation5 + $0x1f8] sm:$0xff]
        %v455 = vld [vmem:[#allocation7] sm:$0x1]
        %v457 = vlaneseq
        %v458 = vshrl.u32 %v457, 7
        %v459 = vsub.s32 0, %v458
        %v460 = vrot.slane %v455, %v459
        %462 = vmatprep.subr.mxu0 0.0
        %463 = vmatpush1.msra.mxu0 %v406
        %464 = vmatprep.subr.mxu0 0.0
        %465 = vmatpush1.msra.mxu0 %v405
        %466 = vmatprep.subr.mxu0 0.0
        %467 = vmatpush1.msra.mxu0 %v404
        %468 = vmatprep.subr.mxu0 0.0
        %469 = vmatpush1.msra.mxu0 %v403
        %470 = vmatprep.subr.mxu0 0.0
        %471 = vmatpush1.msra.mxu0 %v402
        %472 = vmatprep.subr.mxu0 0.0
        %473 = vmatpush1.msra.mxu0 %v401
        %474 = vmatprep.subr.mxu0 0.0
        %475 = vmatpush1.msra.mxu0 %v400
        %476 = vmatprep.subr.mxu0 0.0
        %477 = vmatpush1.msra.mxu0 %v399
        %478 = vmatprep.subr.mxu0 0.0
        %479 = vmatpush1.msra.mxu0 %v398
        %480 = vmatprep.subr.mxu0 0.0
        %481 = vmatpush1.msra.mxu0 %v397
        %482 = vmatprep.subr.mxu0 0.0
        %483 = vmatpush1.msra.mxu0 %v396
        %484 = vmatprep.subr.mxu0 0.0
        %485 = vmatpush1.msra.mxu0 %v395
        %486 = vmatprep.subr.mxu0 0.0
        %487 = vmatpush1.msra.mxu0 %v394
        %488 = vmatprep.subr.mxu0 0.0
        %489 = vmatpush1.msra.mxu0 %v393
        %490 = vmatprep.subr.mxu0 0.0
        %491 = vmatpush1.msra.mxu0 %v392
        %492 = vmatprep.subr.mxu0 0.0
        %493 = vmatpush1.msra.mxu0 %v391
        %494 = vmatprep.subr.mxu0 0.0
        %495 = vmatpush2.msra.mxu0 %v422
        %496 = vmatprep.subr.mxu0 0.0
        %497 = vmatpush2.msra.mxu0 %v421
        %498 = vmatprep.subr.mxu0 0.0
        %499 = vmatpush2.msra.mxu0 %v420
        %500 = vmatprep.subr.mxu0 0.0
        %501 = vmatpush2.msra.mxu0 %v419
        %502 = vmatprep.subr.mxu0 0.0
        %503 = vmatpush2.msra.mxu0 %v418
        %504 = vmatprep.subr.mxu0 0.0
        %505 = vmatpush2.msra.mxu0 %v417
        %506 = vmatprep.subr.mxu0 0.0
        %507 = vmatpush2.msra.mxu0 %v416
        %508 = vmatprep.subr.mxu0 0.0
        %509 = vmatpush2.msra.mxu0 %v415
        %510 = vmatprep.subr.mxu0 0.0
        %511 = vmatpush2.msra.mxu0 %v414
        %512 = vmatprep.subr.mxu0 0.0
        %513 = vmatpush2.msra.mxu0 %v413
        %514 = vmatprep.subr.mxu0 0.0
        %515 = vmatpush2.msra.mxu0 %v412
        %516 = vmatprep.subr.mxu0 0.0
        %517 = vmatpush2.msra.mxu0 %v411
        %518 = vmatprep.subr.mxu0 0.0
        %519 = vmatpush2.msra.mxu0 %v410
        %520 = vmatprep.subr.mxu0 0.0
        %521 = vmatpush2.msra.mxu0 %v409
        %522 = vmatprep.subr.mxu0 0.0
        %523 = vmatpush2.msra.mxu0 %v408
        %524 = vmatprep.subr.mxu0 0.0
        %525 = vmatpush2.msra.mxu0 %v407
        %526 = vmatprep.mubr.f32.mxu0 %v264
        %527 = vmatmul.mubr.f32.gmra.mxu0 %v263
        %v528 = vpop.f32.mrf.mxu0
        %v529 = vadd.f32 %v460, %v528
        %v530 = vpop.f32.mrf.mxu0
        %531 = vmatprep.mubr.f32.mxu0 %v268
        %532 = vmatmul.mubr.f32.gmra.mxu0 %v267
        %v533 = vpop.f32.mrf.mxu0
        %v534 = vadd.f32 %v460, %v533
        %v535 = vpop.f32.mrf.mxu0
        %536 = vmatprep.mubr.f32.mxu0 %v272
        %537 = vmatmul.mubr.f32.gmra.mxu0 %v271
        %v538 = vpop.f32.mrf.mxu0
        %v539 = vadd.f32 %v460, %v538
        %v540 = vpop.f32.mrf.mxu0
        %541 = vmatprep.mubr.f32.mxu0 %v276
        %542 = vmatmul.mubr.f32.gmra.mxu0 %v275
        %v543 = vpop.f32.mrf.mxu0
        %v544 = vadd.f32 %v460, %v543
        %v545 = vpop.f32.mrf.mxu0
        %546 = vmatprep.mubr.f32.mxu0 %v280
        %547 = vmatmul.mubr.f32.gmra.mxu0 %v279
        %v548 = vpop.f32.mrf.mxu0
        %v549 = vadd.f32 %v460, %v548
        %v550 = vpop.f32.mrf.mxu0
        %551 = vmatprep.mubr.f32.mxu0 %v284
        %552 = vmatmul.mubr.f32.gmra.mxu0 %v283
        %v553 = vpop.f32.mrf.mxu0
        %v554 = vadd.f32 %v460, %v553
        %v555 = vpop.f32.mrf.mxu0
        %556 = vmatprep.mubr.f32.mxu0 %v288
        %557 = vmatmul.mubr.f32.gmra.mxu0 %v287
        %v558 = vpop.f32.mrf.mxu0
        %v559 = vadd.f32 %v460, %v558
        %v560 = vpop.f32.mrf.mxu0
        %561 = vmatprep.mubr.f32.mxu0 %v292
        %562 = vmatmul.mubr.f32.gmra.mxu0 %v291
        %v563 = vpop.f32.mrf.mxu0
        %v564 = vadd.f32 %v460, %v563
        %v565 = vpop.f32.mrf.mxu0
        %566 = vmatprep.mubr.f32.mxu0 %v296
        %567 = vmatmul.mubr.f32.gmra.mxu0 %v295
        %v568 = vpop.f32.mrf.mxu0
        %v569 = vadd.f32 %v460, %v568
        %v570 = vpop.f32.mrf.mxu0
        %571 = vmatprep.mubr.f32.mxu0 %v300
        %572 = vmatmul.mubr.f32.gmra.mxu0 %v299
        %v573 = vpop.f32.mrf.mxu0
        %v574 = vadd.f32 %v460, %v573
        %v575 = vpop.f32.mrf.mxu0
        %576 = vmatprep.mubr.f32.mxu0 %v304
        %577 = vmatmul.mubr.f32.gmra.mxu0 %v303
        %v578 = vpop.f32.mrf.mxu0
        %v579 = vadd.f32 %v460, %v578
        %v580 = vpop.f32.mrf.mxu0
        %581 = vmatprep.mubr.f32.mxu0 %v308
        %582 = vmatmul.mubr.f32.gmra.mxu0 %v307
        %v583 = vpop.f32.mrf.mxu0
        %v584 = vadd.f32 %v460, %v583
        %v585 = vpop.f32.mrf.mxu0
        %586 = vmatprep.mubr.f32.mxu0 %v312
        %587 = vmatmul.mubr.f32.gmra.mxu0 %v311
        %v588 = vpop.f32.mrf.mxu0
        %v589 = vadd.f32 %v460, %v588
        %v590 = vpop.f32.mrf.mxu0
        %591 = vmatprep.mubr.f32.mxu0 %v316
        %592 = vmatmul.mubr.f32.gmra.mxu0 %v315
        %v593 = vpop.f32.mrf.mxu0
        %v594 = vadd.f32 %v460, %v593
        %v595 = vpop.f32.mrf.mxu0
        %596 = vmatprep.mubr.f32.mxu0 %v320
        %597 = vmatmul.mubr.f32.gmra.mxu0 %v319
        %v598 = vpop.f32.mrf.mxu0
        %v599 = vadd.f32 %v460, %v598
        %v600 = vpop.f32.mrf.mxu0
        %601 = vmatprep.mubr.f32.mxu0 %v324
        %602 = vmatmul.mubr.f32.gmra.mxu0 %v323
        %v603 = vpop.f32.mrf.mxu0
        %v604 = vadd.f32 %v460, %v603
        %v605 = vpop.f32.mrf.mxu0
        %606 = vmatprep.mubr.f32.mxu0 %v328
        %607 = vmatmul.mubr.f32.gmra.mxu0 %v327
        %v608 = vpop.f32.mrf.mxu0
        %v609 = vadd.f32 %v460, %v608
        %v610 = vpop.f32.mrf.mxu0
        %611 = vmatprep.mubr.f32.mxu0 %v332
        %612 = vmatmul.mubr.f32.gmra.mxu0 %v331
        %v613 = vpop.f32.mrf.mxu0
        %v614 = vadd.f32 %v460, %v613
        %v615 = vpop.f32.mrf.mxu0
        %616 = vmatprep.mubr.f32.mxu0 %v336
        %617 = vmatmul.mubr.f32.gmra.mxu0 %v335
        %v618 = vpop.f32.mrf.mxu0
        %v619 = vadd.f32 %v460, %v618
        %v620 = vpop.f32.mrf.mxu0
        %621 = vmatprep.mubr.f32.mxu0 %v340
        %622 = vmatmul.mubr.f32.gmra.mxu0 %v339
        %v623 = vpop.f32.mrf.mxu0
        %v624 = vadd.f32 %v460, %v623
        %v625 = vpop.f32.mrf.mxu0
        %626 = vmatprep.mubr.f32.mxu0 %v344
        %627 = vmatmul.mubr.f32.gmra.mxu0 %v343
        %v628 = vpop.f32.mrf.mxu0
        %v629 = vadd.f32 %v460, %v628
        %v630 = vpop.f32.mrf.mxu0
        %631 = vmatprep.mubr.f32.mxu0 %v348
        %632 = vmatmul.mubr.f32.gmra.mxu0 %v347
        %v633 = vpop.f32.mrf.mxu0
        %v634 = vadd.f32 %v460, %v633
        %v635 = vpop.f32.mrf.mxu0
        %636 = vmatprep.mubr.f32.mxu0 %v352
        %637 = vmatmul.mubr.f32.gmra.mxu0 %v351
        %v638 = vpop.f32.mrf.mxu0
        %v639 = vadd.f32 %v460, %v638
        %v640 = vpop.f32.mrf.mxu0
        %641 = vmatprep.mubr.f32.mxu0 %v356
        %642 = vmatmul.mubr.f32.gmra.mxu0 %v355
        %v643 = vpop.f32.mrf.mxu0
        %v644 = vadd.f32 %v460, %v643
        %v645 = vpop.f32.mrf.mxu0
        %646 = vmatprep.mubr.f32.mxu0 %v360
        %647 = vmatmul.mubr.f32.gmra.mxu0 %v359
        %v648 = vpop.f32.mrf.mxu0
        %v649 = vadd.f32 %v460, %v648
        %v650 = vpop.f32.mrf.mxu0
        %651 = vmatprep.mubr.f32.mxu0 %v364
        %652 = vmatmul.mubr.f32.gmra.mxu0 %v363
        %v653 = vpop.f32.mrf.mxu0
        %v654 = vadd.f32 %v460, %v653
        %v655 = vpop.f32.mrf.mxu0
        %656 = vmatprep.mubr.f32.mxu0 %v368
        %657 = vmatmul.mubr.f32.gmra.mxu0 %v367
        %v658 = vpop.f32.mrf.mxu0
        %v659 = vadd.f32 %v460, %v658
        %v660 = vpop.f32.mrf.mxu0
        %661 = vmatprep.mubr.f32.mxu0 %v372
        %662 = vmatmul.mubr.f32.gmra.mxu0 %v371
        %v663 = vpop.f32.mrf.mxu0
        %v664 = vadd.f32 %v460, %v663
        %v665 = vpop.f32.mrf.mxu0
        %666 = vmatprep.mubr.f32.mxu0 %v376
        %667 = vmatmul.mubr.f32.gmra.mxu0 %v375
        %v668 = vpop.f32.mrf.mxu0
        %v669 = vadd.f32 %v460, %v668
        %v670 = vpop.f32.mrf.mxu0
        %671 = vmatprep.mubr.f32.mxu0 %v380
        %672 = vmatmul.mubr.f32.gmra.mxu0 %v379
        %v673 = vpop.f32.mrf.mxu0
        %v674 = vadd.f32 %v460, %v673
        %v675 = vpop.f32.mrf.mxu0
        %676 = vmatprep.mubr.f32.mxu0 %v384
        %677 = vmatmul.mubr.f32.gmra.mxu0 %v383
        %v678 = vpop.f32.mrf.mxu0
        %v679 = vadd.f32 %v460, %v678
        %v680 = vpop.f32.mrf.mxu0
        %681 = vmatprep.mubr.f32.mxu0 %v388
        %682 = vmatmul.mubr.f32.gmra.mxu0 %v387
        %v683 = vpop.f32.mrf.mxu0
        %v684 = vadd.f32 %v460, %v683
        %v685 = vpop.f32.mrf.mxu0
        %686 = vdwg.mxu0
        %687 = vmatprep.subr.mxu0 0.0
        %688 = vmatpush1.msra.mxu0 %v438
        %689 = vmatprep.subr.mxu0 0.0
        %690 = vmatpush1.msra.mxu0 %v437
        %691 = vmatprep.subr.mxu0 0.0
        %692 = vmatpush1.msra.mxu0 %v436
        %693 = vmatprep.subr.mxu0 0.0
        %694 = vmatpush1.msra.mxu0 %v435
        %695 = vmatprep.subr.mxu0 0.0
        %696 = vmatpush1.msra.mxu0 %v434
        %697 = vmatprep.subr.mxu0 0.0
        %698 = vmatpush1.msra.mxu0 %v433
        %699 = vmatprep.subr.mxu0 0.0
        %700 = vmatpush1.msra.mxu0 %v432
        %701 = vmatprep.subr.mxu0 0.0
        %702 = vmatpush1.msra.mxu0 %v431
        %703 = vmatprep.subr.mxu0 0.0
        %704 = vmatpush1.msra.mxu0 %v430
        %705 = vmatprep.subr.mxu0 0.0
        %706 = vmatpush1.msra.mxu0 %v429
        %707 = vmatprep.subr.mxu0 0.0
        %708 = vmatpush1.msra.mxu0 %v428
        %709 = vmatprep.subr.mxu0 0.0
        %710 = vmatpush1.msra.mxu0 %v427
        %711 = vmatprep.subr.mxu0 0.0
        %712 = vmatpush1.msra.mxu0 %v426
        %713 = vmatprep.subr.mxu0 0.0
        %714 = vmatpush1.msra.mxu0 %v425
        %715 = vmatprep.subr.mxu0 0.0
        %716 = vmatpush1.msra.mxu0 %v424
        %717 = vmatprep.subr.mxu0 0.0
        %718 = vmatpush1.msra.mxu0 %v423
        %719 = vmatprep.subr.mxu0 0.0
        %720 = vmatpush2.msra.mxu0 %v454
        %721 = vmatprep.subr.mxu0 0.0
        %722 = vmatpush2.msra.mxu0 %v453
        %723 = vmatprep.subr.mxu0 0.0
        %724 = vmatpush2.msra.mxu0 %v452
        %725 = vmatprep.subr.mxu0 0.0
        %726 = vmatpush2.msra.mxu0 %v451
        %727 = vmatprep.subr.mxu0 0.0
        %728 = vmatpush2.msra.mxu0 %v450
        %729 = vmatprep.subr.mxu0 0.0
        %730 = vmatpush2.msra.mxu0 %v449
        %731 = vmatprep.subr.mxu0 0.0
        %732 = vmatpush2.msra.mxu0 %v448
        %733 = vmatprep.subr.mxu0 0.0
        %734 = vmatpush2.msra.mxu0 %v447
        %735 = vmatprep.subr.mxu0 0.0
        %736 = vmatpush2.msra.mxu0 %v446
        %737 = vmatprep.subr.mxu0 0.0
        %738 = vmatpush2.msra.mxu0 %v445
        %739 = vmatprep.subr.mxu0 0.0
        %740 = vmatpush2.msra.mxu0 %v444
        %741 = vmatprep.subr.mxu0 0.0
        %742 = vmatpush2.msra.mxu0 %v443
        %743 = vmatprep.subr.mxu0 0.0
        %744 = vmatpush2.msra.mxu0 %v442
        %745 = vmatprep.subr.mxu0 0.0
        %746 = vmatpush2.msra.mxu0 %v441
        %747 = vmatprep.subr.mxu0 0.0
        %748 = vmatpush2.msra.mxu0 %v440
        %749 = vmatprep.subr.mxu0 0.0
        %750 = vmatpush2.msra.mxu0 %v439
        %751 = vmatprep.mubr.f32.mxu0 %v266
        %752 = vmatmul.mubr.f32.gmra.mxu0 %v265
        %v753 = vpop.f32.mrf.mxu0
        %v754 = vadd.f32 %v529, %v753
        %v755 = vpop.f32.mrf.mxu0
        %756 = vmatprep.mubr.f32.mxu0 %v270
        %757 = vmatmul.mubr.f32.gmra.mxu0 %v269
        %v758 = vpop.f32.mrf.mxu0
        %v759 = vadd.f32 %v534, %v758
        %v760 = vpop.f32.mrf.mxu0
        %761 = vmatprep.mubr.f32.mxu0 %v274
        %762 = vmatmul.mubr.f32.gmra.mxu0 %v273
        %v763 = vpop.f32.mrf.mxu0
        %v764 = vadd.f32 %v539, %v763
        %v765 = vpop.f32.mrf.mxu0
        %766 = vmatprep.mubr.f32.mxu0 %v278
        %767 = vmatmul.mubr.f32.gmra.mxu0 %v277
        %v768 = vpop.f32.mrf.mxu0
        %v769 = vadd.f32 %v544, %v768
        %v770 = vpop.f32.mrf.mxu0
        %771 = vmatprep.mubr.f32.mxu0 %v282
        %772 = vmatmul.mubr.f32.gmra.mxu0 %v281
        %v773 = vpop.f32.mrf.mxu0
        %v774 = vadd.f32 %v549, %v773
        %v775 = vpop.f32.mrf.mxu0
        %776 = vmatprep.mubr.f32.mxu0 %v286
        %777 = vmatmul.mubr.f32.gmra.mxu0 %v285
        %v778 = vpop.f32.mrf.mxu0
        %v779 = vadd.f32 %v554, %v778
        %v780 = vpop.f32.mrf.mxu0
        %781 = vmatprep.mubr.f32.mxu0 %v290
        %782 = vmatmul.mubr.f32.gmra.mxu0 %v289
        %v783 = vpop.f32.mrf.mxu0
        %v784 = vadd.f32 %v559, %v783
        %v785 = vpop.f32.mrf.mxu0
        %786 = vmatprep.mubr.f32.mxu0 %v294
        %787 = vmatmul.mubr.f32.gmra.mxu0 %v293
        %v788 = vpop.f32.mrf.mxu0
        %v789 = vadd.f32 %v564, %v788
        %v790 = vpop.f32.mrf.mxu0
        %791 = vmatprep.mubr.f32.mxu0 %v298
        %792 = vmatmul.mubr.f32.gmra.mxu0 %v297
        %v793 = vpop.f32.mrf.mxu0
        %v794 = vadd.f32 %v569, %v793
        %v795 = vpop.f32.mrf.mxu0
        %796 = vmatprep.mubr.f32.mxu0 %v302
        %797 = vmatmul.mubr.f32.gmra.mxu0 %v301
        %v798 = vpop.f32.mrf.mxu0
        %v799 = vadd.f32 %v574, %v798
        %v800 = vpop.f32.mrf.mxu0
        %801 = vmatprep.mubr.f32.mxu0 %v306
        %802 = vmatmul.mubr.f32.gmra.mxu0 %v305
        %v803 = vpop.f32.mrf.mxu0
        %v804 = vadd.f32 %v579, %v803
        %v805 = vpop.f32.mrf.mxu0
        %806 = vmatprep.mubr.f32.mxu0 %v310
        %807 = vmatmul.mubr.f32.gmra.mxu0 %v309
        %v808 = vpop.f32.mrf.mxu0
        %v809 = vadd.f32 %v584, %v808
        %v810 = vpop.f32.mrf.mxu0
        %811 = vmatprep.mubr.f32.mxu0 %v314
        %812 = vmatmul.mubr.f32.gmra.mxu0 %v313
        %v813 = vpop.f32.mrf.mxu0
        %v814 = vadd.f32 %v589, %v813
        %v815 = vpop.f32.mrf.mxu0
        %816 = vmatprep.mubr.f32.mxu0 %v318
        %817 = vmatmul.mubr.f32.gmra.mxu0 %v317
        %v818 = vpop.f32.mrf.mxu0
        %v819 = vadd.f32 %v594, %v818
        %v820 = vpop.f32.mrf.mxu0
        %821 = vmatprep.mubr.f32.mxu0 %v322
        %822 = vmatmul.mubr.f32.gmra.mxu0 %v321
        %v823 = vpop.f32.mrf.mxu0
        %v824 = vadd.f32 %v599, %v823
        %v825 = vpop.f32.mrf.mxu0
        %826 = vmatprep.mubr.f32.mxu0 %v326
        %827 = vmatmul.mubr.f32.gmra.mxu0 %v325
        %v828 = vpop.f32.mrf.mxu0
        %v829 = vadd.f32 %v604, %v828
        %v830 = vpop.f32.mrf.mxu0
        %831 = vmatprep.mubr.f32.mxu0 %v330
        %832 = vmatmul.mubr.f32.gmra.mxu0 %v329
        %v833 = vpop.f32.mrf.mxu0
        %v834 = vadd.f32 %v609, %v833
        %v835 = vpop.f32.mrf.mxu0
        %836 = vmatprep.mubr.f32.mxu0 %v334
        %837 = vmatmul.mubr.f32.gmra.mxu0 %v333
        %v838 = vpop.f32.mrf.mxu0
        %v839 = vadd.f32 %v614, %v838
        %v840 = vpop.f32.mrf.mxu0
        %841 = vmatprep.mubr.f32.mxu0 %v338
        %842 = vmatmul.mubr.f32.gmra.mxu0 %v337
        %v843 = vpop.f32.mrf.mxu0
        %v844 = vadd.f32 %v619, %v843
        %v845 = vpop.f32.mrf.mxu0
        %846 = vmatprep.mubr.f32.mxu0 %v342
        %847 = vmatmul.mubr.f32.gmra.mxu0 %v341
        %v848 = vpop.f32.mrf.mxu0
        %v849 = vadd.f32 %v624, %v848
        %v850 = vpop.f32.mrf.mxu0
        %851 = vmatprep.mubr.f32.mxu0 %v346
        %852 = vmatmul.mubr.f32.gmra.mxu0 %v345
        %v853 = vpop.f32.mrf.mxu0
        %v854 = vadd.f32 %v629, %v853
        %v855 = vpop.f32.mrf.mxu0
        %856 = vmatprep.mubr.f32.mxu0 %v350
        %857 = vmatmul.mubr.f32.gmra.mxu0 %v349
        %v858 = vpop.f32.mrf.mxu0
        %v859 = vadd.f32 %v634, %v858
        %v860 = vpop.f32.mrf.mxu0
        %861 = vmatprep.mubr.f32.mxu0 %v354
        %862 = vmatmul.mubr.f32.gmra.mxu0 %v353
        %v863 = vpop.f32.mrf.mxu0
        %v864 = vadd.f32 %v639, %v863
        %v865 = vpop.f32.mrf.mxu0
        %866 = vmatprep.mubr.f32.mxu0 %v358
        %867 = vmatmul.mubr.f32.gmra.mxu0 %v357
        %v868 = vpop.f32.mrf.mxu0
        %v869 = vadd.f32 %v644, %v868
        %v870 = vpop.f32.mrf.mxu0
        %871 = vmatprep.mubr.f32.mxu0 %v362
        %872 = vmatmul.mubr.f32.gmra.mxu0 %v361
        %v873 = vpop.f32.mrf.mxu0
        %v874 = vadd.f32 %v649, %v873
        %v875 = vpop.f32.mrf.mxu0
        %876 = vmatprep.mubr.f32.mxu0 %v366
        %877 = vmatmul.mubr.f32.gmra.mxu0 %v365
        %v878 = vpop.f32.mrf.mxu0
        %v879 = vadd.f32 %v654, %v878
        %v880 = vpop.f32.mrf.mxu0
        %881 = vmatprep.mubr.f32.mxu0 %v370
        %882 = vmatmul.mubr.f32.gmra.mxu0 %v369
        %v883 = vpop.f32.mrf.mxu0
        %v884 = vadd.f32 %v659, %v883
        %v885 = vpop.f32.mrf.mxu0
        %886 = vmatprep.mubr.f32.mxu0 %v374
        %887 = vmatmul.mubr.f32.gmra.mxu0 %v373
        %v888 = vpop.f32.mrf.mxu0
        %v889 = vadd.f32 %v664, %v888
        %v890 = vpop.f32.mrf.mxu0
        %891 = vmatprep.mubr.f32.mxu0 %v378
        %892 = vmatmul.mubr.f32.gmra.mxu0 %v377
        %v893 = vpop.f32.mrf.mxu0
        %v894 = vadd.f32 %v669, %v893
        %v895 = vpop.f32.mrf.mxu0
        %896 = vmatprep.mubr.f32.mxu0 %v382
        %897 = vmatmul.mubr.f32.gmra.mxu0 %v381
        %v898 = vpop.f32.mrf.mxu0
        %v899 = vadd.f32 %v674, %v898
        %v900 = vpop.f32.mrf.mxu0
        %901 = vmatprep.mubr.f32.mxu0 %v386
        %902 = vmatmul.mubr.f32.gmra.mxu0 %v385
        %v903 = vpop.f32.mrf.mxu0
        %v904 = vadd.f32 %v679, %v903
        %v905 = vpop.f32.mrf.mxu0
        %906 = vmatprep.mubr.f32.mxu0 %v390
        %907 = vmatmul.mubr.f32.gmra.mxu0 %v389
        %v908 = vpop.f32.mrf.mxu0
        %v909 = vadd.f32 %v684, %v908
        %v910 = vpop.f32.mrf.mxu0
        %911 = vdwg.mxu0
        %912 = vst [vmem:[%s251] sm:$0xff] %v754
        %913 = vst [vmem:[%s251 + $0x8] sm:$0xff] %v759
        %914 = vst [vmem:[%s251 + $0x10] sm:$0xff] %v764
        %915 = vst [vmem:[%s251 + $0x18] sm:$0xff] %v769
        %916 = vst [vmem:[%s251 + $0x20] sm:$0xff] %v774
        %917 = vst [vmem:[%s251 + $0x28] sm:$0xff] %v779
        %918 = vst [vmem:[%s251 + $0x30] sm:$0xff] %v784
        %919 = vst [vmem:[%s251 + $0x38] sm:$0xff] %v789
        %920 = vst [vmem:[%s251 + $0x40] sm:$0xff] %v794
        %921 = vst [vmem:[%s251 + $0x48] sm:$0xff] %v799
        %922 = vst [vmem:[%s251 + $0x50] sm:$0xff] %v804
        %923 = vst [vmem:[%s251 + $0x58] sm:$0xff] %v809
        %924 = vst [vmem:[%s251 + $0x60] sm:$0xff] %v814
        %925 = vst [vmem:[%s251 + $0x68] sm:$0xff] %v819
        %926 = vst [vmem:[%s251 + $0x70] sm:$0xff] %v824
        %927 = vst [vmem:[%s251 + $0x78] sm:$0xff] %v829
        %928 = vst [vmem:[%s251 + $0x80] sm:$0xff] %v834
        %929 = vst [vmem:[%s251 + $0x88] sm:$0xff] %v839
        %930 = vst [vmem:[%s251 + $0x90] sm:$0xff] %v844
        %931 = vst [vmem:[%s251 + $0x98] sm:$0xff] %v849
        %932 = vst [vmem:[%s251 + $0xa0] sm:$0xff] %v854
        %933 = vst [vmem:[%s251 + $0xa8] sm:$0xff] %v859
        %934 = vst [vmem:[%s251 + $0xb0] sm:$0xff] %v864
        %935 = vst [vmem:[%s251 + $0xb8] sm:$0xff] %v869
        %936 = vst [vmem:[%s251 + $0xc0] sm:$0xff] %v874
        %937 = vst [vmem:[%s251 + $0xc8] sm:$0xff] %v879
        %938 = vst [vmem:[%s251 + $0xd0] sm:$0xff] %v884
        %939 = vst [vmem:[%s251 + $0xd8] sm:$0xff] %v889
        %940 = vst [vmem:[%s251 + $0xe0] sm:$0xff] %v894
        %941 = vst [vmem:[%s251 + $0xe8] sm:$0xff] %v899
        %942 = vst [vmem:[%s251 + $0xf0] sm:$0xff] %v904
        %943 = vst [vmem:[%s251 + $0xf8] sm:$0xff] %v909
        %s944 = sand.u32 %s121, 1
        %s945 = scalar_lea.sflag [#allocation4], %s944
        %s946 = sand.u32 %s121, 1
        %s947 = smul.addr %s946, 256
        %s948 = scalar_lea.vmem [#allocation8], %s947
        // Predicated region
        $region45: #{tpu_custom_call.1} parent=31 // pred_check
          %p949 = pneg %p131
        $region46: #{tpu_custom_call.1} parent=31 // pred_check_branch
          %951 = sbr.rel (%p949) target = $region48
        $region47: #{tpu_custom_call.1} parent=31 // pred_region
          %s952 = smul.u32 32, %s26
          %s953 = ssub.s32 125, %s952
          %p954 = scmp.lt.s32.totalorder %s953, 32
          %s955 = scalar_select %p954, %s953, 32
          %s956 = smul.u32 128, %s955
          %s958 = ssub.s32 4096, %s956
          %959 = vsyncadd %s945, %s958
          %p960 = scmp.ne.s32.totalorder 0, %s956
          %s961 = sadd.s32 %s25, %s952
          %s962 = smul.addr %s961, 128
          %s963 = scalar_lea.hbm %s3, %s962
          %s964 = smul.u32 8, %s955
          %s965 = sshll.u32 %s948, 4
          %s966 = int_to_ptr.vmem [resolvable:$true] %s965
          %s967 = sshll.u32 %s964, 4
          %971 = dma.vmem_to_hbm [thread:$0]  (%p960), %s966, %s967, %s963, %s945, 128, 128, 8
        $region48: #{tpu_custom_call.1} parent=31 // pred_fallthru
          _
      $region32: #{tpu_custom_call.1} parent=5 // pred_fallthru
        _
      %p972 = scmp.le.s32.totalorder 2, %s16
      // Predicated region
      $region49: #{tpu_custom_call.1} parent=5 // pred_check
        %p973 = pneg %p972
      $region50: #{tpu_custom_call.1} parent=5 // pred_check_branch
        %975 = sbr.rel (%p973) target = $region52
      $region51: #{tpu_custom_call.1} parent=5 // pred_region
        %s976 = ssub.s32 %s16, 2
        // Predicated region
        $region53: #{tpu_custom_call.1} parent=51 // pred_check
          %p977 = pneg %p137
        $region54: #{tpu_custom_call.1} parent=51 // pred_check_branch
          %979 = sbr.rel (%p977) target = $region56
        $region55: #{tpu_custom_call.1} parent=51 // pred_region
          %s980 = sand.u32 %s122, 1
          %s981 = scalar_lea.sflag [#allocation4], %s980
          %s982 = sand.u32 %s122, 1
          %s983 = smul.addr %s982, 256
          %s984 = scalar_lea.vmem [#allocation8], %s983
          %985 = dma.done %s981, 4096
        $region56: #{tpu_custom_call.1} parent=51 // pred_fallthru
          _
      $region52: #{tpu_custom_call.1} parent=5 // pred_fallthru
        _
    $region6: #{tpu_custom_call.1} parent=1 // loop_footer
      %s20 = sadd.s32 1, %s16
    $region7: #{tpu_custom_call.1} parent=1 // loop_footer_branch
      %15 = sbr.rel target = $region3
    $region8: #{tpu_custom_call.1} parent=1 // loop_exit
      _
    %986 = vsyncpa [#allocation3], 1
    %s987 = scalar_lea.sflag [#allocation3], 1
    %988 = vsyncpa %s987, 1
    %989 = vsyncpa [#allocation6], 1
    %990 = vsyncpa [#allocation4], 1
    %s991 = scalar_lea.sflag [#allocation4], 1
    %992 = vsyncpa %s991, 1

</llo_original>
